<compile_context>
chip_gen: v7x
topology: tpu7x:2x2x1
jax: 0.10.0
libtpu: 0.0.40
codegen_flags: <defaults>
</compile_context>

<pallas_src>
import functools
import math

import jax
import jax.numpy as jnp
from jax import lax
from jax.experimental import pallas as pl
from jax.experimental.pallas import tpu as pltpu


def _round_up(x, m):
    return ((x + m - 1) // m) * m


def _pick_tile(n, candidates):
    """Largest candidate that divides n, else the full dimension."""
    for c in candidates:
        if n % c == 0:
            return c
    return n


def _vmem_limit(nbytes):
    """Per-kernel scoped-VMEM ceiling: actual need + headroom, capped under v7x 64MiB."""
    return int(min(max(nbytes + (8 << 20), 24 << 20), 48 << 20))


# ----------------------------------------------------------------------------
# Kernel 1: tiled fused linear   out = act(x @ w + b)   (bf16 MXU, f32 accum)
# ----------------------------------------------------------------------------
def _linear_kernel(x_ref, w_ref, b_ref, o_ref, acc_ref, *, act):
    @pl.when(pl.program_id(2) == 0)
    def _init():
        acc_ref[...] = jnp.zeros_like(acc_ref)

    acc_ref[...] += jnp.dot(x_ref[...], w_ref[...],
                            preferred_element_type=jnp.float32)

    @pl.when(pl.program_id(2) == pl.num_programs(2) - 1)
    def _finalize():
        y = acc_ref[...] + b_ref[...]
        if act == "tanh":
            y = jnp.tanh(y)
        elif act == "relu":
            y = jnp.maximum(y, 0.0)
        o_ref[...] = y.astype(o_ref.dtype)


def pallas_linear(x, w, b, act="none", out_dtype=jnp.float32, *,
                  tm=256, tn=256, tk=512):
    lead = x.shape[:-1]
    K = x.shape[-1]
    N = w.shape[-1]
    M = int(math.prod(lead))

    # Never fall back to a full-dim giant tile; pad to aligned tile multiples instead.
    tm = min(tm, _round_up(M, 8))
    tn = min(tn, _round_up(N, 128))
    tk = min(tk, _round_up(K, 128))
    Mp, Np, Kp = _round_up(M, tm), _round_up(N, tn), _round_up(K, tk)

    x2 = x.reshape(M, K)
    if x2.dtype != jnp.bfloat16:
        x2 = x2.astype(jnp.bfloat16)
    if (Mp, Kp) != (M, K):
        x2 = jnp.pad(x2, ((0, Mp - M), (0, Kp - K)))
    wb = w if w.dtype == jnp.bfloat16 else w.astype(jnp.bfloat16)
    if (Kp, Np) != (K, N):
        wb = jnp.pad(wb, ((0, Kp - K), (0, Np - N)))
    b2 = b.reshape(1, N).astype(jnp.float32)
    if Np != N:
        b2 = jnp.pad(b2, ((0, 0), (0, Np - N)))

    osz = jnp.dtype(out_dtype).itemsize
    nbytes = 2 * (tm * tk * 2 + tk * tn * 2 + tn * 4 + tm * tn * osz) + tm * tn * 4

    out = pl.pallas_call(
        functools.partial(_linear_kernel, act=act),
        out_shape=jax.ShapeDtypeStruct((Mp, Np), out_dtype),
        grid=(Mp // tm, Np // tn, Kp // tk),
        in_specs=[
            pl.BlockSpec((tm, tk), lambda i, j, k: (i, k)),
            pl.BlockSpec((tk, tn), lambda i, j, k: (k, j)),
            pl.BlockSpec((1, tn), lambda i, j, k: (0, j)),
        ],
        out_specs=pl.BlockSpec((tm, tn), lambda i, j, k: (i, j)),
        scratch_shapes=[pltpu.VMEM((tm, tn), jnp.float32)],
        compiler_params=pltpu.CompilerParams(
            dimension_semantics=("parallel", "parallel", "arbitrary"),
            vmem_limit_bytes=_vmem_limit(nbytes)),
    )(x2, wb, b2)
    if (Mp, Np) != (M, N):
        out = out[:M, :N]
    return out.reshape(*lead, N)


# ----------------------------------------------------------------------------
# Kernel 2: pairwise edge head.  For head block i, tail block j, batch b:
#   logits[b, i, j, :] = relu(head_proj[b,i] + tail_proj[b,j]) @ W_cls + b_cls
# Two variants: full logits, and fused argmax -> rel_type (int32), which lets the
# add_rgcn path skip materializing / permuting / argmax-ing the first edge pass.
# ----------------------------------------------------------------------------
def _edge_pair_logits(ah, at, wcls, bcls):
    # ah: [TI, Hh] bf16 (b_edge already folded into the head projection),
    # at: [TJ, Hh] bf16.  One flat [TI*TJ, Hh] @ [Hh, C] MXU dot (full M occupancy).
    ti, hh = ah.shape
    tj = at.shape[0]
    pair = jnp.maximum(ah[:, None, :] + at[None, :, :], 0)          # [TI, TJ, Hh] bf16
    logits = jnp.dot(pair.reshape(ti * tj, hh), wcls,
                     preferred_element_type=jnp.float32) + bcls      # [TI*TJ, C] f32
    return logits.reshape(ti, tj, wcls.shape[1])                     # [TI, TJ, C]


def _edge_logits_kernel(ah_ref, at_ref, wcls_ref, bcls_ref, o_ref):
    o_ref[0] = _edge_pair_logits(ah_ref[0], at_ref[0], wcls_ref[...],
                                 bcls_ref[...]).astype(o_ref.dtype)


def _edge_rel_kernel(ah_ref, at_ref, wcls_ref, bcls_ref, rel_ref, *, n_cls):
    logits = _edge_pair_logits(ah_ref[0], at_ref[0], wcls_ref[...], bcls_ref[...])
    # first-occurrence argmax over C without leaving the kernel
    m = jnp.max(logits, axis=-1, keepdims=True)
    idx = lax.broadcasted_iota(jnp.float32, logits.shape, 2)
    rel = jnp.min(jnp.where(logits >= m, idx, float(n_cls)), axis=-1)  # [TI, TJ]
    rel_ref[0] = rel.astype(jnp.int32)


def _edge_operands(proj, hh):
    """head/tail operands.  When Hh is lane-aligned the fused projection buffer is
    sliced for free via BlockSpec column blocks (no XLA slice copies)."""
    if hh % 128 == 0:
        return proj, proj, 1           # tail columns live at column-block index 1
    return proj[..., :hh], proj[..., hh:2 * hh], 0


def _edge_specs(hh, c, ti, tj, tail_blk):
    return [
        pl.BlockSpec((1, ti, hh), lambda b, i, j: (b, i, 0)),
        pl.BlockSpec((1, tj, hh), lambda b, i, j, t=tail_blk: (b, j, t)),
        pl.BlockSpec((hh, c), lambda b, i, j: (0, 0)),
        pl.BlockSpec((1, c), lambda b, i, j: (0, 0)),
    ]


def pallas_edge_logits(proj, hh, wcls_bf, bcls2, logits_dtype=jnp.float32):
    """grapher.edges() on a [B, N, >=2Hh] head|tail projection -> [N, N, B, C]."""
    B, N, _ = proj.shape
    C = wcls_bf.shape[1]
    TI = _pick_tile(N, (32, 16, 8))
    TJ = _pick_tile(N, (128,))
    harr, tarr, tblk = _edge_operands(proj, hh)
    out_blk = _round_up(TI, 8) * _round_up(TJ, 8) * _round_up(C, 128) * 4
    nbytes = (2 * (TI * hh * 2 + TJ * hh * 2 + hh * C * 2 + C * 4 + out_blk)
              + 2 * TI * TJ * _round_up(hh, 128) * 2)
    out = pl.pallas_call(
        _edge_logits_kernel,
        out_shape=jax.ShapeDtypeStruct((B, N, N, C), logits_dtype),
        grid=(B, N // TI, N // TJ),
        in_specs=_edge_specs(hh, C, TI, TJ, tblk),
        out_specs=pl.BlockSpec((1, TI, TJ, C), lambda b, i, j: (b, i, j, 0)),
        compiler_params=pltpu.CompilerParams(
            dimension_semantics=("parallel", "parallel", "parallel"),
            vmem_limit_bytes=_vmem_limit(nbytes)),
    )(harr, tarr, wcls_bf, bcls2)
    # grapher convention is [N, N, B, C] (so permute(2,0,1,3) matches PyTorch);
    # the kernel computes in the natural [B, N, N, C] layout, single transpose at end.
    return jnp.transpose(out, (1, 2, 0, 3))


def pallas_edge_rel_type(proj, hh, wcls_bf, bcls2):
    """Fused  edges(f).permute(2,0,1,3).argmax(-1)  -> rel_type [B, N, N] int32."""
    B, N, _ = proj.shape
    C = wcls_bf.shape[1]
    TI = _pick_tile(N, (32, 16, 8))
    TJ = _pick_tile(N, (128,))
    harr, tarr, tblk = _edge_operands(proj, hh)
    out_blk = _round_up(TI, 8) * _round_up(TJ, 128) * 4
    nbytes = (2 * (TI * hh * 2 + TJ * hh * 2 + hh * C * 2 + C * 4 + out_blk)
              + 2 * TI * TJ * _round_up(hh, 128) * 2)
    return pl.pallas_call(
        functools.partial(_edge_rel_kernel, n_cls=C),
        out_shape=jax.ShapeDtypeStruct((B, N, N), jnp.int32),
        grid=(B, N // TI, N // TJ),
        in_specs=_edge_specs(hh, C, TI, TJ, tblk),
        out_specs=pl.BlockSpec((1, TI, TJ), lambda b, i, j: (b, i, j)),
        compiler_params=pltpu.CompilerParams(
            dimension_semantics=("parallel", "parallel", "parallel"),
            vmem_limit_bytes=_vmem_limit(nbytes)),
    )(harr, tarr, wcls_bf, bcls2)


# ----------------------------------------------------------------------------
# Kernel 3: R-GCN layer (per batch element, grid=(B,)):
#   out = relu( [f | agg_0 | ... | agg_{R'-1}] @ [W_self; W_rel...] + b )
# where agg_r = (rel == r) @ f, degree-normalized (exact f32 division AFTER the
# matmul).  adj_list is implicit: for r != noedge_cl, (rel == r) already excludes
# no-edge entries, and relation r == noedge_cl (agg identically 0) is skipped.
# Per-relation 0/1 masks are written into a VMEM slab (bounds live ranges) and
# aggregated with ONE tall [R'*N, N] @ [N, H] dot.
# ----------------------------------------------------------------------------
def _rgcn_kernel(feat_ref, rel_ref, wbig_ref, b_ref, o_ref,
                 mstack_ref, hstack_ref, *, kept_rels, fuse_proj):
    feat = feat_ref[0]                                     # [N, H] f32
    rel = rel_ref[0]                                       # [N, N] int32
    N, H = feat.shape
    R = len(kept_rels)
    feat_bf = feat.astype(jnp.bfloat16)

    # 1) vertically stacked exact 0/1 masks (stores bound the per-relation live set).
    for idx, r in enumerate(kept_rels):                    # static unroll, R small
        mstack_ref[idx * N:(idx + 1) * N, :] = (rel == r).astype(mstack_ref.dtype)
    masks = mstack_ref[...]                                # [R*N, N] bf16 (0/1 exact)

    # 2) one tall aggregation matmul; exact f32 degree normalization afterwards.
    deg = jnp.maximum(jnp.sum(masks.astype(jnp.float32), axis=-1, keepdims=True), 1.0)
    agg = jnp.dot(masks, feat_bf, preferred_element_type=jnp.float32) / deg  # [R*N, H]

    # 3) fused projection: [f | agg_0 | ... ] @ [W_self; W_rel...]  (one MXU dot
    #    when H is lane-aligned, per-relation accumulation otherwise).
    if fuse_proj:
        hstack_ref[:, :H] = feat_bf
        for idx in range(R):
            hstack_ref[:, (idx + 1) * H:(idx + 2) * H] = (
                agg[idx * N:(idx + 1) * N, :].astype(jnp.bfloat16))
        out = jnp.dot(hstack_ref[...], wbig_ref[...],
                      preferred_element_type=jnp.float32)
    else:
        out = jnp.dot(feat_bf, wbig_ref[0:H, :], preferred_element_type=jnp.float32)
        for idx in range(R):
            out = out + jnp.dot(agg[idx * N:(idx + 1) * N, :].astype(jnp.bfloat16),
                                wbig_ref[(idx + 1) * H:(idx + 2) * H, :],
                                preferred_element_type=jnp.float32)
    o_ref[0] = jnp.maximum(out + b_ref[...], 0.0)


def pallas_rgcn(features, rel_type, q):
    B, N, H = features.shape
    kept = q["kept_rels"]
    R = len(kept)
    fuse_proj = (H % 128 == 0)
    wbig = q["W_rgcn"]                                      # [(R+1)*H, H] bf16
    nbytes = (2 * (N * H * 4 + N * N * 4 + (R + 1) * H * H * 2 + H * 4 + N * H * 4)
              + R * N * N * 2 + N * (R + 1) * H * 2 + R * N * H * 4)
    return pl.pallas_call(
        functools.partial(_rgcn_kernel, kept_rels=kept, fuse_proj=fuse_proj),
        out_shape=jax.ShapeDtypeStruct((B, N, H), jnp.float32),
        grid=(B,),
        in_specs=[
            pl.BlockSpec((1, N, H), lambda b: (b, 0, 0)),
            pl.BlockSpec((1, N, N), lambda b: (b, 0, 0)),
            pl.BlockSpec(((R + 1) * H, H), lambda b: (0, 0)),
            pl.BlockSpec((1, H), lambda b: (0, 0)),
        ],
        out_specs=pl.BlockSpec((1, N, H), lambda b: (b, 0, 0)),
        scratch_shapes=[pltpu.VMEM((R * N, N), jnp.bfloat16),
                        pltpu.VMEM((N, (R + 1) * H), jnp.bfloat16)],
        compiler_params=pltpu.CompilerParams(
            dimension_semantics=("parallel",),
            vmem_limit_bytes=_vmem_limit(nbytes)),
    )(features.astype(jnp.float32), rel_type.astype(jnp.int32), wbig, q["b_self2"])


# ----------------------------------------------------------------------------
# Parameter preparation: all bf16 casts / weight concatenations hoisted out of
# the forward pass (done once, not per call).
# ----------------------------------------------------------------------------
def prepare_params(p, noedge_cl):
    H, Hh = p["W_head"].shape
    R = p["W_rel"].shape[0]
    kept = tuple(r for r in range(R) if r != noedge_cl)
    q = dict(p)
    q["W_feat_bf"] = p["W_feat"].astype(jnp.bfloat16)
    # fused [head | tail | vocab] projection over features (b_edge folded into head)
    q["W_htv"] = jnp.concatenate(
        [p["W_head"], p["W_tail"], p["W_vocab"]], axis=1).astype(jnp.bfloat16)
    q["b_htv"] = jnp.concatenate(
        [p["b_edge"], jnp.zeros_like(p["b_edge"]), p["b_vocab"]]).astype(jnp.float32)
    # [head | tail] only, for the second edge pass (post-RGCN features)
    q["W_ht"] = jnp.concatenate([p["W_head"], p["W_tail"]], axis=1).astype(jnp.bfloat16)
    q["b_ht"] = jnp.concatenate(
        [p["b_edge"], jnp.zeros_like(p["b_edge"])]).astype(jnp.float32)
    q["W_cls_bf"] = p["W_cls"].astype(jnp.bfloat16)
    q["b_cls2"] = p["b_cls"].reshape(1, -1).astype(jnp.float32)
    # R-GCN stacked weight: [W_self; W_rel[r] for r != noedge_cl]
    q["W_rgcn"] = jnp.concatenate(
        [p["W_self"]] + [p["W_rel"][r] for r in kept], axis=0).astype(jnp.bfloat16)
    q["b_self2"] = p["b_self"].reshape(1, -1).astype(jnp.float32)
    q["kept_rels"] = kept
    return q


# ----------------------------------------------------------------------------
# Synthetic "grapher" forward (matches the interface used by AdvancedGrapher).
# ----------------------------------------------------------------------------
def _grapher_backbone(q, text, text_mask, target_nodes, target_nodes_mask):
    # XLA glue: embedding gathers + masked mean pooling over the text sequence.
    emb_text = q["E_text"][text]                                 # [B, S, H]
    m = text_mask.astype(jnp.float32)[..., None]
    pooled = (emb_text * m).sum(1) / jnp.maximum(m.sum(1), 1.0)  # [B, H]
    node_emb = q["E_node"][target_nodes]                         # [B, N, H]
    B, N, H = node_emb.shape
    ctx = jnp.broadcast_to(pooled[:, None, :], (B, N, H))
    x = jnp.concatenate([node_emb, ctx], axis=-1)                # [B, N, 2H]

    features = pallas_linear(x, q["W_feat_bf"], q["b_feat"], act="tanh")  # [B, N, H] f32
    features = features * target_nodes_mask.astype(jnp.float32)[..., None]

    # Single fused head over features: [head_proj | tail_proj | vocab_logits], bf16.
    fused = pallas_linear(features, q["W_htv"], q["b_htv"],
                          out_dtype=jnp.bfloat16)                # [B, N, 2Hh+V] bf16
    Hh = q["W_head"].shape[1]
    logits_nodes = fused[..., 2 * Hh:].astype(jnp.float32)       # [B, N, V]
    return logits_nodes, features, fused


def grapher_forward(q, text, text_mask, target_nodes, target_nodes_mask,
                    target_edges, include_features=False):
    del target_edges  # targets are only used for the loss in the original model
    logits_nodes, features, fused = _grapher_backbone(
        q, text, text_mask, target_nodes, target_nodes_mask)
    Hh = q["W_head"].shape[1]
    logits_edges = pallas_edge_logits(fused, Hh, q["W_cls_bf"], q["b_cls2"])
    if include_features:
        return logits_nodes, logits_edges, features
    return logits_nodes, logits_edges


# ----------------------------------------------------------------------------
# AdvancedGrapher.forward
# ----------------------------------------------------------------------------
def advanced_grapher_forward(q, text, text_mask, target_nodes, target_nodes_mask,
                             target_edges, *, noedge_cl, add_rgcn):
    if not add_rgcn:
        return grapher_forward(q, text, text_mask, target_nodes,
                               target_nodes_mask, target_edges)
    # add_rgcn path.  PyTorch materializes the first logits_edges only to
    # permute(2,0,1,3).argmax(-1) it; here that argmax is fused into the edge
    # kernel so only an int32 [B, N, N] rel_type map ever hits HBM.  adj_list
    # (= rel_type != noedge_cl) is folded into the R-GCN kernel.
    logits_nodes, features, fused = _grapher_backbone(
        q, text, text_mask, target_nodes, target_nodes_mask)
    Hh = q["W_head"].shape[1]
    rel_type = pallas_edge_rel_type(fused, Hh, q["W_cls_bf"], q["b_cls2"])  # [B,N,N]
    features = pallas_rgcn(features, rel_type, q)              # rgcn(features, adj, rel)
    proj2 = pallas_linear(features, q["W_ht"], q["b_ht"],
                          out_dtype=jnp.bfloat16)              # [B, N, 2Hh] bf16
    logits_edges = pallas_edge_logits(proj2, Hh, q["W_cls_bf"], q["b_cls2"])
    return logits_nodes, logits_edges

# TODO(synk): `sample()` relies on self.grapher.transformer.generate (autoregressive
# HuggingFace decoding); no clean Pallas equivalent, only forward() is implemented.


# ----------------------------------------------------------------------------
# Deterministic parameter init + demo
# ----------------------------------------------------------------------------
def init_params(key, *, V_text, V_node, H, Hh, C):
    ks = jax.random.split(key, 12)
    n = lambda k, shape, s: (jax.random.normal(k, shape, jnp.float32) * s)
    return {
        "E_text": n(ks[0], (V_text, H), 0.02),
        "E_node": n(ks[1], (V_node, H), 0.02),
        "W_feat": n(ks[2], (2 * H, H), 1.0 / math.sqrt(2 * H)),
        "b_feat": jnp.zeros((H,), jnp.float32),
        "W_vocab": n(ks[3], (H, V_node), 1.0 / math.sqrt(H)),
        "b_vocab": jnp.zeros((V_node,), jnp.float32),
        "W_head": n(ks[4], (H, Hh), 1.0 / math.sqrt(H)),
        "W_tail": n(ks[5], (H, Hh), 1.0 / math.sqrt(H)),
        "b_edge": jnp.zeros((Hh,), jnp.float32),
        "W_cls": n(ks[6], (Hh, C), 1.0 / math.sqrt(Hh)),
        "b_cls": jnp.zeros((C,), jnp.float32),
        "W_rel": n(ks[7], (C, H, H), 1.0 / math.sqrt(H)),
        "W_self": n(ks[8], (H, H), 1.0 / math.sqrt(H)),
        "b_self": jnp.zeros((H,), jnp.float32),
    }


if __name__ == "__main__":
    # Small but lane-friendly shapes (H = Hh = 128 keep projections and the stacked
    # R-GCN contraction lane-aligned; non-aligned shapes fall back automatically).
    B, S, N, H, Hh = 2, 8, 8, 128, 128
    V_text, V_node, C = 64, 128, 8
    noedge_cl = C - 1

    key = jax.random.PRNGKey(0)
    kp, k1, k2, k3 = jax.random.split(key, 4)
    params = init_params(kp, V_text=V_text, V_node=V_node, H=H, Hh=Hh, C=C)
    q = prepare_params(params, noedge_cl)   # weight casts/concats hoisted out of forward

    text = jax.random.randint(k1, (B, S), 0, V_text, jnp.int32)
    text_mask = jnp.ones((B, S), jnp.float32).at[:, -2:].set(0.0)
    target_nodes = jax.random.randint(k2, (B, N), 0, V_node, jnp.int32)
    target_nodes_mask = jnp.ones((B, N), jnp.float32)
    target_edges = jax.random.randint(k3, (B, N, N), 0, C, jnp.int32)

    logits_nodes, logits_edges = advanced_grapher_forward(
        q, text, text_mask, target_nodes, target_nodes_mask, target_edges,
        noedge_cl=noedge_cl, add_rgcn=True)

    jax.block_until_ready((logits_nodes, logits_edges))
    assert logits_nodes.shape == (B, N, V_node)
    assert logits_edges.shape == (N, N, B, C)
    assert bool(jnp.all(jnp.isfinite(logits_nodes)))
    assert bool(jnp.all(jnp.isfinite(logits_edges)))
    print("KERNEL_OK")
</pallas_src>

<mosaic_0001>
module attributes {stable_mosaic.version = 11 : i64} {
  func.func @_linear_kernel(%arg0: i32, %arg1: i32, %arg2: i32, %arg3: memref<16x256xbf16, #tpu.memory_space<vmem>>, %arg4: memref<256x128xbf16, #tpu.memory_space<vmem>>, %arg5: memref<1x128xf32, #tpu.memory_space<vmem>>, %arg6: memref<16x128xf32, #tpu.memory_space<vmem>>, %arg7: memref<16x128xf32, #tpu.memory_space<vmem>>) attributes {dimension_semantics = [#tpu.dimension_semantics<parallel>, #tpu.dimension_semantics<parallel>, #tpu.dimension_semantics<arbitrary>], iteration_bounds = array<i64: 1, 1, 1>, scalar_prefetch = 0 : i64, scratch_operands = 1 : i64, tpu.core_type = #tpu.core_type<tc>, window_params = [{transform_indices = @transform_0, window_bounds = array<i64: 16, 256>}, {transform_indices = @transform_1, window_bounds = array<i64: 256, 128>}, {transform_indices = @transform_2, window_bounds = array<i64: 1, 128>}, {transform_indices = @transform_3, window_bounds = array<i64: 16, 128>}]} {
    %c0_i32 = arith.constant 0 : i32
    %0 = arith.cmpi eq, %arg2, %c0_i32 : i32
    %1 = arith.extui %0 : i1 to i32
    %c0_i32_0 = arith.constant 0 : i32
    %2 = arith.cmpi ne, %1, %c0_i32_0 : i32
    scf.if %2 {
      %cst_10 = arith.constant 0.000000e+00 : f32
      %12 = vector.broadcast %cst_10 : f32 to vector<16x128xf32>
      %c0_11 = arith.constant 0 : index
      %c0_12 = arith.constant 0 : index
      %13 = vector.load %arg7[%c0_11, %c0_12] : memref<16x128xf32, #tpu.memory_space<vmem>>, vector<16x128xf32>
      tpu.vector_store %arg7[%c0_11, %c0_12], %12 {strides = array<i32>} : memref<16x128xf32, #tpu.memory_space<vmem>>, vector<16x128xf32>,
    } else {
    }
    %c0 = arith.constant 0 : index
    %c0_1 = arith.constant 0 : index
    %3 = vector.load %arg7[%c0, %c0_1] : memref<16x128xf32, #tpu.memory_space<vmem>>, vector<16x128xf32>
    %c0_2 = arith.constant 0 : index
    %c0_3 = arith.constant 0 : index
    %4 = vector.load %arg3[%c0_2, %c0_3] : memref<16x256xbf16, #tpu.memory_space<vmem>>, vector<16x256xbf16>
    %c0_4 = arith.constant 0 : index
    %c0_5 = arith.constant 0 : index
    %5 = vector.load %arg4[%c0_4, %c0_5] : memref<256x128xbf16, #tpu.memory_space<vmem>>, vector<256x128xbf16>
    %cst = arith.constant dense<0.000000e+00> : vector<16x128xf32>
    %6 = tpu.matmul %4, %5, %cst {dimension_numbers = #tpu.dot_dimension_numbers<[1], [0], [0], [1], [0, 0, 1, 1], [], []>} : vector<16x256xbf16>, vector<256x128xbf16>, vector<16x128xf32> -> vector<16x128xf32>
    %7 = arith.addf %3, %6 : vector<16x128xf32>
    %c0_6 = arith.constant 0 : index
    %c0_7 = arith.constant 0 : index
    %8 = vector.load %arg7[%c0_6, %c0_7] : memref<16x128xf32, #tpu.memory_space<vmem>>, vector<16x128xf32>
    tpu.vector_store %arg7[%c0_6, %c0_7], %7 {strides = array<i32>} : memref<16x128xf32, #tpu.memory_space<vmem>>, vector<16x128xf32>,
    %c0_i32_8 = arith.constant 0 : i32
    %9 = arith.cmpi eq, %arg2, %c0_i32_8 : i32
    %10 = arith.extui %9 : i1 to i32
    %c0_i32_9 = arith.constant 0 : i32
    %11 = arith.cmpi ne, %10, %c0_i32_9 : i32
    scf.if %11 {
      %c0_10 = arith.constant 0 : index
      %c0_11 = arith.constant 0 : index
      %12 = vector.load %arg7[%c0_10, %c0_11] : memref<16x128xf32, #tpu.memory_space<vmem>>, vector<16x128xf32>
      %c0_12 = arith.constant 0 : index
      %c0_13 = arith.constant 0 : index
      %13 = vector.load %arg5[%c0_12, %c0_13] : memref<1x128xf32, #tpu.memory_space<vmem>>, vector<1x128xf32>
      %14 = vector.broadcast %13 : vector<1x128xf32> to vector<16x128xf32>
      %15 = arith.addf %12, %14 : vector<16x128xf32>
      %16 = math.tanh %15 : vector<16x128xf32>
      %c0_14 = arith.constant 0 : index
      %c0_15 = arith.constant 0 : index
      %17 = vector.load %arg6[%c0_14, %c0_15] : memref<16x128xf32, #tpu.memory_space<vmem>>, vector<16x128xf32>
      tpu.vector_store %arg6[%c0_14, %c0_15], %16 {strides = array<i32>} : memref<16x128xf32, #tpu.memory_space<vmem>>, vector<16x128xf32>,
    } else {
    }
    return
  }
  func.func @transform_0(%arg0: i32, %arg1: i32, %arg2: i32) -> (i32, i32) {
    %c0_i32 = arith.constant 0 : i32
    return %arg0, %arg2 : i32, i32
  }
  func.func @transform_1(%arg0: i32, %arg1: i32, %arg2: i32) -> (i32, i32) {
    %c0_i32 = arith.constant 0 : i32
    return %arg2, %arg1 : i32, i32
  }
  func.func @transform_2(%arg0: i32, %arg1: i32, %arg2: i32) -> (i32, i32) {
    %c0_i32 = arith.constant 0 : i32
    %c0_i32_0 = arith.constant 0 : i32
    return %c0_i32, %arg1 : i32, i32
  }
  func.func @transform_3(%arg0: i32, %arg1: i32, %arg2: i32) -> (i32, i32) {
    %c0_i32 = arith.constant 0 : i32
    return %arg0, %arg1 : i32, i32
  }
}

</mosaic_0001>

<llo_original>
// kernel: tpu_custom_call.1
$region0: #{tpu_custom_call.1}
  #allocation0 [shape = 'u32[]', space=smem, size = 0x4, offset = 0x4, fixed_abs, tag = 'smem constant byte address 0x4 - core index']
  #allocation1 [shape = 'u32[144,128]{1,0:T(1,128)}', space=vmem, size = 0x12000, scoped, tag = 'internal scratch']
  #allocation2 [shape = 'f32[16,128]{1,0:T(8,128)}', space=vmem, size = 0x2000, scoped, tag = 'scratch operand']
  %s0 = inlined_call_operand.hbm [shape: bf16[16,256], index: 0, kind: input, shape index: {}]
  %s1 = inlined_call_operand.hbm [shape: bf16[256,128], index: 1, kind: input, shape index: {}]
  %s2 = inlined_call_operand.vmem [shape: f32[1,128], index: 2, kind: input, shape index: {}]
  %s3 = inlined_call_operand.hbm [shape: f32[16,128], index: 3, kind: output, shape index: {}]
  %s4 = sld [smem:[#allocation0]]
  $region38: #{tpu_custom_call.1} parent=0
    _
  %s6 = ssub.s32 1, %s4
  %s7 = scalar_select 0, %s6, %s4
  $region1: #{tpu_custom_call.1} parent=0
    #allocation3 [shape = 'u8[8192]{0}', space=vmem, size = 0x2000, scoped, tag = 'input window, operand 0, single buffered']
    #allocation4 [shape = 's32[1]{0}', space=sflag, size = 0x4, scoped, tag = 'scoped memory for tpu_custom_call.1']
    #allocation5 [shape = 's32[1]{0}', space=sflag, size = 0x4, scoped, tag = 'scoped memory for tpu_custom_call.1']
    #allocation6 [shape = 'u8[65536]{0}', space=vmem, size = 0x10000, scoped, tag = 'input window, operand 1, single buffered']
    #allocation7 [shape = 's32[1]{0}', space=sflag, size = 0x4, scoped, tag = 'scoped memory for tpu_custom_call.1']
    #allocation8 [shape = 'u8[8192]{0}', space=vmem, size = 0x2000, scoped, tag = 'output window, operand 0, single buffered']
    %8 = vsyncpa [#allocation4], 0
    %9 = vsyncpa [#allocation7], 0
    %10 = vsyncpa [#allocation5], 0
    // Predicated region
    $region2: #{tpu_custom_call.1} parent=1 // pred_check
      _
    $region3: #{tpu_custom_call.1} parent=1 // pred_check_branch
      %12 = sbr.rel (0) target = $region5
    $region4: #{tpu_custom_call.1} parent=1 // pred_region
      %s14 = ssub.s32 256, 256
      %15 = vsyncadd [#allocation4], %s14
      %s16 = sshll.u32 [#allocation3], 4
      %s17 = int_to_ptr.vmem [resolvable:$true] %s16
      %22 = dma.hbm_to_vmem [thread:$0]  %s0, 256, %s17, [#allocation4], 128, 128, 8
    $region5: #{tpu_custom_call.1} parent=1 // pred_fallthru
      _
    // Predicated region
    $region6: #{tpu_custom_call.1} parent=1 // pred_check
      _
    $region7: #{tpu_custom_call.1} parent=1 // pred_check_branch
      %24 = sbr.rel (0) target = $region9
    $region8: #{tpu_custom_call.1} parent=1 // pred_region
      %s26 = ssub.s32 2048, 2048
      %27 = vsyncadd [#allocation7], %s26
      %s28 = sshll.u32 [#allocation6], 4
      %s29 = int_to_ptr.vmem [resolvable:$true] %s28
      %34 = dma.hbm_to_vmem [thread:$0]  %s1, 2048, %s29, [#allocation7], 64, 64, 4
    $region9: #{tpu_custom_call.1} parent=1 // pred_fallthru
      _
    // Predicated region
    $region10: #{tpu_custom_call.1} parent=1 // pred_check
      _
    $region11: #{tpu_custom_call.1} parent=1 // pred_check_branch
      %36 = sbr.rel (0) target = $region13
    $region12: #{tpu_custom_call.1} parent=1 // pred_region
      _
    $region13: #{tpu_custom_call.1} parent=1 // pred_fallthru
      _
    // Predicated region
    $region14: #{tpu_custom_call.1} parent=1 // pred_check
      _
    $region15: #{tpu_custom_call.1} parent=1 // pred_check_branch
      %38 = sbr.rel (0) target = $region17
    $region16: #{tpu_custom_call.1} parent=1 // pred_region
      %39 = dma.done [#allocation4], 256
    $region17: #{tpu_custom_call.1} parent=1 // pred_fallthru
      _
    // Predicated region
    $region18: #{tpu_custom_call.1} parent=1 // pred_check
      _
    $region19: #{tpu_custom_call.1} parent=1 // pred_check_branch
      %41 = sbr.rel (0) target = $region21
    $region20: #{tpu_custom_call.1} parent=1 // pred_region
      %42 = dma.done [#allocation7], 2048
    $region21: #{tpu_custom_call.1} parent=1 // pred_fallthru
      _
    %p44 = scmp.eq.s32.totalorder 0, 0
    // Predicated region
    $region22: #{tpu_custom_call.1} parent=1 // pred_check
      %p45 = pneg %p44
    $region23: #{tpu_custom_call.1} parent=1 // pred_check_branch
      %47 = sbr.rel (%p45) target = $region25
    $region24: #{tpu_custom_call.1} parent=1 // pred_region
      %48 = vst [vmem:[#allocation2] sm:$0xff] 0.0
      %49 = vst [vmem:[#allocation2 + $0x8] sm:$0xff] 0.0
    $region25: #{tpu_custom_call.1} parent=1 // pred_fallthru
      _
    %v50 = vld [vmem:[#allocation2] sm:$0xff]
    %v51 = vld [vmem:[#allocation2 + $0x8] sm:$0xff]
    %v52 = vld [vmem:[#allocation3] sm:$0xff]
    %v53 = vld [vmem:[#allocation3 + $0x8] sm:$0xff]
    %v54 = vld [vmem:[#allocation6] sm:$0xf]
    %v55 = vld [vmem:[#allocation6 + $0x4] sm:$0xf]
    %v56 = vld [vmem:[#allocation6 + $0x8] sm:$0xf]
    %v57 = vld [vmem:[#allocation6 + $0xc] sm:$0xf]
    %v58 = vld [vmem:[#allocation6 + $0x10] sm:$0xf]
    %v59 = vld [vmem:[#allocation6 + $0x14] sm:$0xf]
    %v60 = vld [vmem:[#allocation6 + $0x18] sm:$0xf]
    %v61 = vld [vmem:[#allocation6 + $0x1c] sm:$0xf]
    %v62 = vld [vmem:[#allocation6 + $0x20] sm:$0xf]
    %v63 = vld [vmem:[#allocation6 + $0x24] sm:$0xf]
    %v64 = vld [vmem:[#allocation6 + $0x28] sm:$0xf]
    %v65 = vld [vmem:[#allocation6 + $0x2c] sm:$0xf]
    %v66 = vld [vmem:[#allocation6 + $0x30] sm:$0xf]
    %v67 = vld [vmem:[#allocation6 + $0x34] sm:$0xf]
    %v68 = vld [vmem:[#allocation6 + $0x38] sm:$0xf]
    %v69 = vld [vmem:[#allocation6 + $0x3c] sm:$0xf]
    %v70 = vld [vmem:[#allocation6 + $0x40] sm:$0xf]
    %v71 = vld [vmem:[#allocation6 + $0x44] sm:$0xf]
    %v72 = vld [vmem:[#allocation6 + $0x48] sm:$0xf]
    %v73 = vld [vmem:[#allocation6 + $0x4c] sm:$0xf]
    %v74 = vld [vmem:[#allocation6 + $0x50] sm:$0xf]
    %v75 = vld [vmem:[#allocation6 + $0x54] sm:$0xf]
    %v76 = vld [vmem:[#allocation6 + $0x58] sm:$0xf]
    %v77 = vld [vmem:[#allocation6 + $0x5c] sm:$0xf]
    %v78 = vld [vmem:[#allocation6 + $0x60] sm:$0xf]
    %v79 = vld [vmem:[#allocation6 + $0x64] sm:$0xf]
    %v80 = vld [vmem:[#allocation6 + $0x68] sm:$0xf]
    %v81 = vld [vmem:[#allocation6 + $0x6c] sm:$0xf]
    %v82 = vld [vmem:[#allocation6 + $0x70] sm:$0xf]
    %v83 = vld [vmem:[#allocation6 + $0x74] sm:$0xf]
    %v84 = vld [vmem:[#allocation6 + $0x78] sm:$0xf]
    %v85 = vld [vmem:[#allocation6 + $0x7c] sm:$0xf]
    %v88 = vunpack.c.l.b16 %v52
    %v89 = vunpack.c.h.b16 %v52
    %v90 = vunpack.c.l.b16 %v53
    %v91 = vunpack.c.h.b16 %v53
    %v92 = vpack.c.b16 %v90, %v88
    %v93 = vpack.c.b16 %v91, %v89
    %v128 = vunpack.c.l.b16 %v54
    %v129 = vunpack.c.l.b16 %v55
    %v130 = vunpack.c.l.b16 %v56
    %v131 = vunpack.c.l.b16 %v57
    %v132 = vunpack.c.l.b16 %v58
    %v133 = vunpack.c.l.b16 %v59
    %v134 = vunpack.c.l.b16 %v60
    %v135 = vunpack.c.l.b16 %v61
    %v136 = vunpack.c.l.b16 %v62
    %v137 = vunpack.c.l.b16 %v63
    %v138 = vunpack.c.l.b16 %v64
    %v139 = vunpack.c.l.b16 %v65
    %v140 = vunpack.c.l.b16 %v66
    %v141 = vunpack.c.l.b16 %v67
    %v142 = vunpack.c.l.b16 %v68
    %v143 = vunpack.c.l.b16 %v69
    %v144 = vunpack.c.l.b16 %v70
    %v145 = vunpack.c.l.b16 %v71
    %v146 = vunpack.c.l.b16 %v72
    %v147 = vunpack.c.l.b16 %v73
    %v148 = vunpack.c.l.b16 %v74
    %v149 = vunpack.c.l.b16 %v75
    %v150 = vunpack.c.l.b16 %v76
    %v151 = vunpack.c.l.b16 %v77
    %v152 = vunpack.c.l.b16 %v78
    %v153 = vunpack.c.l.b16 %v79
    %v154 = vunpack.c.l.b16 %v80
    %v155 = vunpack.c.l.b16 %v81
    %v156 = vunpack.c.l.b16 %v82
    %v157 = vunpack.c.l.b16 %v83
    %v158 = vunpack.c.l.b16 %v84
    %v159 = vunpack.c.l.b16 %v85
    %v160 = vpack.c.b16 %v129, %v128
    %v161 = vpack.c.b16 %v131, %v130
    %v162 = vpack.c.b16 %v133, %v132
    %v163 = vpack.c.b16 %v135, %v134
    %v164 = vpack.c.b16 %v137, %v136
    %v165 = vpack.c.b16 %v139, %v138
    %v166 = vpack.c.b16 %v141, %v140
    %v167 = vpack.c.b16 %v143, %v142
    %v168 = vpack.c.b16 %v145, %v144
    %v169 = vpack.c.b16 %v147, %v146
    %v170 = vpack.c.b16 %v149, %v148
    %v171 = vpack.c.b16 %v151, %v150
    %v172 = vpack.c.b16 %v153, %v152
    %v173 = vpack.c.b16 %v155, %v154
    %v174 = vpack.c.b16 %v157, %v156
    %v175 = vpack.c.b16 %v159, %v158
    %192 = vmatprep.subr.bf16.mxu0 0
    %193 = vmatpush1.bf16.msra.mxu0 %v160
    %194 = vmatprep.subr.bf16.mxu0 0
    %195 = vmatpush1.bf16.msra.mxu0 %v161
    %196 = vmatprep.subr.bf16.mxu0 0
    %197 = vmatpush1.bf16.msra.mxu0 %v162
    %198 = vmatprep.subr.bf16.mxu0 0
    %199 = vmatpush1.bf16.msra.mxu0 %v163
    %200 = vmatprep.subr.bf16.mxu0 0
    %201 = vmatpush1.bf16.msra.mxu0 %v164
    %202 = vmatprep.subr.bf16.mxu0 0
    %203 = vmatpush1.bf16.msra.mxu0 %v165
    %204 = vmatprep.subr.bf16.mxu0 0
    %205 = vmatpush1.bf16.msra.mxu0 %v166
    %206 = vmatprep.subr.bf16.mxu0 0
    %207 = vmatpush1.bf16.msra.mxu0 %v167
    %208 = vmatprep.subr.bf16.mxu0 0
    %209 = vmatpush1.bf16.msra.mxu0 %v168
    %210 = vmatprep.subr.bf16.mxu0 0
    %211 = vmatpush1.bf16.msra.mxu0 %v169
    %212 = vmatprep.subr.bf16.mxu0 0
    %213 = vmatpush1.bf16.msra.mxu0 %v170
    %214 = vmatprep.subr.bf16.mxu0 0
    %215 = vmatpush1.bf16.msra.mxu0 %v171
    %216 = vmatprep.subr.bf16.mxu0 0
    %217 = vmatpush1.bf16.msra.mxu0 %v172
    %218 = vmatprep.subr.bf16.mxu0 0
    %219 = vmatpush1.bf16.msra.mxu0 %v173
    %220 = vmatprep.subr.bf16.mxu0 0
    %221 = vmatpush1.bf16.msra.mxu0 %v174
    %222 = vmatprep.subr.bf16.mxu0 0
    %223 = vmatpush1.bf16.msra.mxu0 %v175
    %224 = vmatprep.mubr.bf16.mxu0 %v93
    %225 = vmatmul.mubr.bf16.gmra.mrb[0].mxu0 %v92
    %v226 = vpop.f32.mrb[0].mxu0
    %v227 = vadd.f32 0.0, %v226
    %v228 = vpop.f32.mrb[0].mxu0
    %v229 = vpop.f32.mrb[0].mxu0
    %v230 = vadd.f32 0.0, %v229
    %v231 = vpop.f32.mrb[0].mxu0
    %232 = vdwg.mxu0
    %v233 = vadd.f32 %v50, %v227
    %v234 = vadd.f32 %v51, %v230
    %235 = vst [vmem:[#allocation2] sm:$0xff] %v233
    %236 = vst [vmem:[#allocation2 + $0x8] sm:$0xff] %v234
    // Predicated region
    $region26: #{tpu_custom_call.1} parent=1 // pred_check
      %p237 = pneg %p44
    $region27: #{tpu_custom_call.1} parent=1 // pred_check_branch
      %239 = sbr.rel (%p237) target = $region29
    $region28: #{tpu_custom_call.1} parent=1 // pred_region
      %v240 = vld [vmem:[#allocation2] sm:$0xff]
      %v241 = vld [vmem:[#allocation2 + $0x8] sm:$0xff]
      %v242 = vld [vmem:[%s2] sm:$0x1]
      %v244 = vlaneseq
      %v245 = vshrl.u32 %v244, 7
      %v246 = vsub.s32 0, %v245
      %v247 = vrot.slane %v242, %v246
      %v249 = vadd.f32 %v240, %v247
      %v250 = vadd.f32 %v241, %v247
      %v251 = vtanh.pop %v249
      %v252 = vtanh.pop %v250
      %253 = vst [vmem:[#allocation8] sm:$0xff] %v251
      %254 = vst [vmem:[#allocation8 + $0x8] sm:$0xff] %v252
    $region29: #{tpu_custom_call.1} parent=1 // pred_fallthru
      _
    // Predicated region
    $region30: #{tpu_custom_call.1} parent=1 // pred_check
      _
    $region31: #{tpu_custom_call.1} parent=1 // pred_check_branch
      %256 = sbr.rel (0) target = $region33
    $region32: #{tpu_custom_call.1} parent=1 // pred_region
      %s258 = ssub.s32 256, 256
      %259 = vsyncadd [#allocation5], %s258
      %s260 = sshll.u32 [#allocation8], 4
      %s261 = int_to_ptr.vmem [resolvable:$true] %s260
      %266 = dma.vmem_to_hbm [thread:$0]  %s261, 256, %s3, [#allocation5], 128, 128, 8
    $region33: #{tpu_custom_call.1} parent=1 // pred_fallthru
      _
    // Predicated region
    $region34: #{tpu_custom_call.1} parent=1 // pred_check
      _
    $region35: #{tpu_custom_call.1} parent=1 // pred_check_branch
      %268 = sbr.rel (0) target = $region37
    $region36: #{tpu_custom_call.1} parent=1 // pred_region
      %269 = dma.done [#allocation5], 256
    $region37: #{tpu_custom_call.1} parent=1 // pred_fallthru
      _
    %270 = vsyncpa [#allocation4], 1
    %271 = vsyncpa [#allocation7], 1
    %272 = vsyncpa [#allocation5], 1

</llo_original>
